<compile_context>
chip_gen: v7x
topology: tpu7x:2x2x1
jax: 0.10.0
libtpu: 0.0.40
codegen_flags: <defaults>
</compile_context>

<pallas_src>
import math
from typing import Any, Dict, Optional, Union

import jax
import jax.numpy as jnp
from jax import lax
from jax.experimental import pallas as pl
from jax.experimental.pallas import tpu as pltpu


_PER_TILE_BYTES_BUDGET = 2 << 20     # per x-tile cap; double-buffered in+out ~8 MiB,
                                     # safe under v5e's 16 MiB scoped-VMEM default
_MAX_SINGLE_BLOCK_BYTES = 8 << 20    # huge ragged blocks -> XLA fallback
_MIN_PALLAS_BYTES = 512 * 1024       # total-bytes gate: smaller leaves stay in XLA
_MAX_ZERO_ROW_BYTES = 4 << 20        # zero-template row must fit comfortably in VMEM


# ---------------------------------------------------------------------------
# Kernel 1: streaming broadcast-multiply  y = x * mask  (mask tile is (TB, 1))
# ---------------------------------------------------------------------------
def _mask_mul_kernel(x_ref, m_ref, o_ref):
    # mask is pre-cast to x.dtype in the wrapper -> no per-block VPU cast here
    o_ref[...] = x_ref[...] * m_ref[...]


# ---------------------------------------------------------------------------
# Kernel 2: zero dropped rows in-place (input aliased to output, mask in SMEM)
# ---------------------------------------------------------------------------
def _zero_dropped_rows_kernel(keep_ref, x_ref, o_ref, zrow_ref, sem_ref):
    # x_ref is the same HBM buffer as o_ref (input_output_aliases): rows with
    # keep==1 need no work at all; rows with keep==0 get a small VMEM->HBM
    # zero-store DMA. Only ~dropout-fraction of the tensor bytes touch HBM.
    del x_ref
    zrow_ref[...] = jnp.zeros_like(zrow_ref)
    nrows = o_ref.shape[0]

    def body(b, carry):
        @pl.when(keep_ref[b] == 0)
        def _():
            cp = pltpu.make_async_copy(
                zrow_ref, o_ref.at[pl.ds(b, 1), :], sem_ref.at[0])
            cp.start()
            cp.wait()
        return carry

    lax.fori_loop(0, nrows, body, 0)


# ---------------------------------------------------------------------------
# Tiling
# ---------------------------------------------------------------------------
def _choose_tiles(B: int, N: int, itemsize: int):
    """Lane-dense, VMEM-safe (TB, TN) tiles for a (B, N) leaf."""
    pack = max(1, 4 // itemsize)      # rows per sublane (f32:1, bf16:2, int8:4)
    sub = 8 * pack                    # dtype-native sublane tile along batch axis
    budget = _PER_TILE_BYTES_BUDGET
    if B % sub == 0:
        unit = sub
    elif B % 8 == 0:
        unit = 8                      # 8-aligned but not pack-aligned: minor tax
    else:
        unit = B                      # ragged batch dim -> single full-B block
    TN = N                            # prefer whole rows: one contiguous DMA run/row
    rows_fit = max(1, budget // max(1, TN * itemsize))
    if unit == B:
        TB = B
    else:
        TB = min(B, 512, max(unit, (rows_fit // unit) * unit))
    if TB * TN * itemsize > budget and N % 128 == 0:
        # even a single batch-unit of full rows blows the budget: split features
        TN = max(128, ((budget // max(1, TB * itemsize)) // 128) * 128)
        TN = min(TN, N)
    return TB, TN, unit


def _mask_mul_2d(x2d: jax.Array, mask_col: jax.Array) -> jax.Array:
    """x2d: (B, N), mask_col: (B, 1) in x2d.dtype -> (B, N), tiled & pipelined."""
    B, N = x2d.shape
    itemsize = x2d.dtype.itemsize
    TB, TN, unit = _choose_tiles(B, N, itemsize)
    # v7x has 2 TensorCores per chip: avoid a single-block grid on leaves that
    # already justify a pallas_call so both cores get work (harmless on v5e/v6e).
    if pl.cdiv(B, TB) * pl.cdiv(N, TN) == 1:
        if unit != B and TB % (2 * unit) == 0:
            TB //= 2
        elif TN % 256 == 0:
            TN //= 2
    grid = (pl.cdiv(B, TB), pl.cdiv(N, TN))
    cost = pl.CostEstimate(flops=B * N, transcendentals=0,
                           bytes_accessed=2 * B * N * itemsize + B * itemsize)
    return pl.pallas_call(
        _mask_mul_kernel,
        out_shape=jax.ShapeDtypeStruct((B, N), x2d.dtype),
        grid_spec=pltpu.PrefetchScalarGridSpec(
            num_scalar_prefetch=0,
            grid=grid,
            in_specs=[
                pl.BlockSpec((TB, TN), lambda i, j: (i, j)),
                pl.BlockSpec((TB, 1), lambda i, j: (i, 0)),
            ],
            out_specs=pl.BlockSpec((TB, TN), lambda i, j: (i, j)),
        ),
        compiler_params=pltpu.CompilerParams(
            dimension_semantics=("parallel", "parallel")),
        cost_estimate=cost,
    )(x2d, mask_col)


# ---------------------------------------------------------------------------
# Per-leaf wrappers
# ---------------------------------------------------------------------------
def _apply_leaf_mul(x: jax.Array, mask: jax.Array) -> jax.Array:
    """Generic x * mask (mask may hold arbitrary values), broadcast over batch."""
    orig_shape = x.shape
    if x.size == 0:
        return x
    B = orig_shape[0]
    N = math.prod(orig_shape[1:]) if x.ndim > 1 else 1
    bshape = (B,) + (1,) * (x.ndim - 1)
    total_bytes = B * N * x.dtype.itemsize
    if total_bytes < _MIN_PALLAS_BYTES:
        # Small leaves: pallas_call launch/pipeline overhead dominates and it
        # blocks XLA fusion with neighbors -> fused broadcast-multiply instead.
        return x * mask.reshape(bshape).astype(x.dtype)
    TB, TN, _ = _choose_tiles(B, N, x.dtype.itemsize)
    if TB * TN * x.dtype.itemsize > _MAX_SINGLE_BLOCK_BYTES:
        # TODO(synk): huge ragged (non-128-multiple) feature dims can't be tiled
        # lane-dense; fall back to XLA's fused broadcast-multiply.
        return x * mask.reshape(bshape).astype(x.dtype)
    y2d = _mask_mul_2d(x.reshape(B, N), mask.reshape(B, 1).astype(x.dtype))
    return y2d.reshape(orig_shape)


def _apply_leaf_drop(x: jax.Array, keep_i32: jax.Array) -> jax.Array:
    """x * keep with keep in {0,1}: alias input->output and only zero-store the
    dropped rows, cutting HBM traffic to ~dropout fraction of the tensor bytes."""
    orig_shape = x.shape
    if x.size == 0:
        return x
    B = orig_shape[0]
    N = math.prod(orig_shape[1:]) if x.ndim > 1 else 1
    total_bytes = B * N * x.dtype.itemsize
    row_bytes = N * x.dtype.itemsize
    if total_bytes < _MIN_PALLAS_BYTES or row_bytes > _MAX_ZERO_ROW_BYTES:
        # TODO(synk): tile the zero-row DMA for rows larger than the VMEM template.
        return _apply_leaf_mul(x, keep_i32.astype(jnp.float32))
    x2d = x.reshape(B, N)
    cost = pl.CostEstimate(flops=0, transcendentals=0,
                           bytes_accessed=B * N * x.dtype.itemsize)
    y2d = pl.pallas_call(
        _zero_dropped_rows_kernel,
        out_shape=jax.ShapeDtypeStruct((B, N), x.dtype),
        grid_spec=pltpu.PrefetchScalarGridSpec(
            num_scalar_prefetch=1,          # keep mask -> SMEM
            grid=(1,),
            in_specs=[pl.BlockSpec(memory_space=pl.ANY)],
            out_specs=pl.BlockSpec(memory_space=pl.ANY),
            scratch_shapes=[
                pltpu.VMEM((1, N), x.dtype),          # zero template row
                pltpu.SemaphoreType.DMA((1,)),
            ],
        ),
        input_output_aliases={1: 0},        # arg 0 = keep mask, arg 1 = x2d
        compiler_params=pltpu.CompilerParams(
            dimension_semantics=("arbitrary",)),
        cost_estimate=cost,
    )(keep_i32, x2d)
    return y2d.reshape(orig_shape)


# ---------------------------------------------------------------------------
# Module-level helpers (API parity with cleandiffuser)
# ---------------------------------------------------------------------------
def get_mask(condition, prob: float, key: Optional[jax.Array], dims: int = 0):
    """Bernoulli keep-mask over the batch dim (dims=0). prob = drop probability."""
    leaf = condition
    while isinstance(leaf, dict):
        leaf = next(iter(leaf.values()))
    B = leaf.shape[dims]
    if prob <= 0.0 or key is None:
        return jnp.ones((B,), dtype=jnp.float32)
    return (jax.random.uniform(key, (B,)) > prob).astype(jnp.float32)


def dict_operation(condition, mask, op):
    if isinstance(condition, dict):
        return {k: dict_operation(v, mask, op) for k, v in condition.items()}
    return op(condition, mask)


class IdentityCondition:
    """JAX/Pallas port of cleandiffuser IdentityCondition (identity map with a
    classifier-free-guidance style per-batch dropout mask). No 1/(1-p) rescaling,
    matching the PyTorch reference."""

    def __init__(self, dropout: float = 0.25):
        self.dropout = dropout
        self.training = False  # inference mode by default

    def __call__(self,
                 condition: Union[Dict[str, Any], jax.Array],
                 mask: Optional[jax.Array] = None,
                 *,
                 key: Optional[jax.Array] = None):
        if mask is not None:
            # Explicit mask can hold arbitrary values -> generic multiply path.
            return dict_operation(condition, mask, _apply_leaf_mul)
        prob = self.dropout if self.training else 0.0
        if prob <= 0.0 or key is None:
            # Identity fast path: mask would be all-ones -> skip all HBM traffic.
            return condition
        # Training dropout: keep-mask is guaranteed 0/1 -> zero-dropped-rows path.
        leaf = condition
        while isinstance(leaf, dict):
            leaf = next(iter(leaf.values()))
        B = leaf.shape[0]
        keep_i32 = (jax.random.uniform(key, (B,)) > prob).astype(jnp.int32)
        return dict_operation(condition, keep_i32, _apply_leaf_drop)


if __name__ == "__main__":
    key = jax.random.PRNGKey(0)
    k1, k2, k3, k4, k5, k_drop = jax.random.split(key, 6)

    nn_condition = IdentityCondition(dropout=0.25)

    # --- Eval mode: identity fast path (no kernel launch, exact passthrough). ---
    x = jax.random.normal(k1, (2, 3), dtype=jnp.float32)
    y = nn_condition(x)
    jax.block_until_ready(y)
    assert y.shape == x.shape and jnp.allclose(y, x)

    cond = {
        "image": jax.random.normal(k2, (2, 4, 16, 16), dtype=jnp.float32),
        "lowdim": jax.random.normal(k3, (2, 7), dtype=jnp.float32),
    }
    y_dict = nn_condition(cond)
    jax.block_until_ready(y_dict["image"])
    assert y_dict["image"].shape == (2, 4, 16, 16)
    assert y_dict["lowdim"].shape == (2, 7)
    assert jnp.allclose(y_dict["image"], cond["image"])
    assert jnp.allclose(y_dict["lowdim"], cond["lowdim"])

    # --- Explicit mask on small dict leaves: total-bytes gate -> fused XLA path. ---
    explicit_mask = jnp.array([1.0, 0.0], dtype=jnp.float32)
    y_masked = nn_condition(cond, mask=explicit_mask)
    jax.block_until_ready(y_masked["image"])
    assert jnp.allclose(y_masked["image"][0], cond["image"][0])
    assert jnp.allclose(y_masked["image"][1], jnp.zeros_like(cond["image"][1]))
    assert jnp.allclose(y_masked["lowdim"][0], cond["lowdim"][0])
    assert jnp.allclose(y_masked["lowdim"][1], jnp.zeros_like(cond["lowdim"][1]))

    # --- Explicit non-binary mask on a 1 MiB leaf: streaming Pallas multiply. ---
    big = jax.random.normal(k4, (64, 4096), dtype=jnp.float32)
    big_mask = 0.25 + 0.5 * jax.random.uniform(k5, (64,), dtype=jnp.float32)
    y_big = nn_condition(big, mask=big_mask)
    jax.block_until_ready(y_big)
    assert jnp.allclose(y_big, big * big_mask[:, None])

    # --- bf16 leaf: dtype-pack-aware TB (16) and full-row TN through Pallas. ---
    big_bf = jax.random.normal(k5, (32, 8192), dtype=jnp.bfloat16)
    bf_mask = (jnp.arange(32) % 2).astype(jnp.float32)
    y_bf = nn_condition(big_bf, mask=bf_mask)
    jax.block_until_ready(y_bf)
    assert jnp.allclose(y_bf, big_bf * bf_mask[:, None].astype(jnp.bfloat16))

    # --- Training mode with a dropout key: aliased zero-dropped-rows kernel. ---
    nn_condition.training = True
    y_train = nn_condition(big, key=k_drop)
    jax.block_until_ready(y_train)
    row_kept = jnp.all(jnp.isclose(y_train, big), axis=1)
    row_zero = jnp.all(y_train == 0.0, axis=1)
    assert bool(jnp.all(row_kept | row_zero))
    # original input must be untouched (XLA inserts a copy when x isn't donated)
    assert bool(jnp.all(jnp.isfinite(big))) and big.shape == (64, 4096)

    print("KERNEL_OK")
</pallas_src>

<mosaic_0001>
module attributes {stable_mosaic.version = 11 : i64} {
  func.func @_mask_mul_kernel(%arg0: i32, %arg1: i32, %arg2: memref<32x4096xf32, #tpu.memory_space<vmem>>, %arg3: memref<32x1xf32, #tpu.memory_space<vmem>>, %arg4: memref<32x4096xf32, #tpu.memory_space<vmem>>) attributes {dimension_semantics = [#tpu.dimension_semantics<parallel>, #tpu.dimension_semantics<parallel>], iteration_bounds = array<i64: 2, 1>, scalar_prefetch = 0 : i64, scratch_operands = 0 : i64, tpu.core_type = #tpu.core_type<tc>, window_params = [{transform_indices = @transform_0, window_bounds = array<i64: 32, 4096>}, {transform_indices = @transform_1, window_bounds = array<i64: 32, 1>}, {transform_indices = @transform_2, window_bounds = array<i64: 32, 4096>}]} {
    %c0 = arith.constant 0 : index
    %c0_0 = arith.constant 0 : index
    %0 = vector.load %arg2[%c0, %c0_0] : memref<32x4096xf32, #tpu.memory_space<vmem>>, vector<32x4096xf32>
    %c0_1 = arith.constant 0 : index
    %c0_2 = arith.constant 0 : index
    %1 = vector.load %arg3[%c0_1, %c0_2] : memref<32x1xf32, #tpu.memory_space<vmem>>, vector<32x1xf32>
    %2 = vector.broadcast %1 : vector<32x1xf32> to vector<32x4096xf32>
    %3 = arith.mulf %0, %2 : vector<32x4096xf32>
    %c0_3 = arith.constant 0 : index
    %c0_4 = arith.constant 0 : index
    %4 = vector.load %arg4[%c0_3, %c0_4] : memref<32x4096xf32, #tpu.memory_space<vmem>>, vector<32x4096xf32>
    tpu.vector_store %arg4[%c0_3, %c0_4], %3 {strides = array<i32>} : memref<32x4096xf32, #tpu.memory_space<vmem>>, vector<32x4096xf32>,
    return
  }
  func.func @transform_0(%arg0: i32, %arg1: i32) -> (i32, i32) {
    %c0_i32 = arith.constant 0 : i32
    return %arg0, %arg1 : i32, i32
  }
  func.func @transform_1(%arg0: i32, %arg1: i32) -> (i32, i32) {
    %c0_i32 = arith.constant 0 : i32
    %c0_i32_0 = arith.constant 0 : i32
    return %arg0, %c0_i32 : i32, i32
  }
  func.func @transform_2(%arg0: i32, %arg1: i32) -> (i32, i32) {
    %c0_i32 = arith.constant 0 : i32
    return %arg0, %arg1 : i32, i32
  }
}

</mosaic_0001>

<llo_original>
// kernel: tpu_custom_call.1
$region0: #{tpu_custom_call.1}
  #allocation0 [shape = 'u32[]', space=smem, size = 0x4, offset = 0x4, fixed_abs, tag = 'smem constant byte address 0x4 - core index']
  #allocation1 [shape = 'u32[144,128]{1,0:T(1,128)}', space=vmem, size = 0x12000, scoped, tag = 'internal scratch']
  %s0 = inlined_call_operand.hbm [shape: f32[64,4096], index: 0, kind: input, shape index: {}]
  %s1 = inlined_call_operand.vmem [shape: f32[64,1], index: 1, kind: input, shape index: {}]
  %s2 = inlined_call_operand.hbm [shape: f32[64,4096], index: 2, kind: output, shape index: {}]
  %s3 = sld [smem:[#allocation0]]
  $region45: #{tpu_custom_call.1} parent=0
    _
  %s5 = ssub.s32 1, %s3
  %s6 = scalar_select 0, %s5, %s3
  $region1: #{tpu_custom_call.1} parent=0
    #allocation2 [shape = 'u8[1048576]{0}', space=vmem, size = 0x100000, scoped, tag = 'input window, operand 0']
    #allocation3 [shape = 's32[2]{0}', space=sflag, size = 0x8, scoped, tag = 'scoped memory for tpu_custom_call.1']
    #allocation4 [shape = 's32[2]{0}', space=sflag, size = 0x8, scoped, tag = 'scoped memory for tpu_custom_call.1']
    #allocation5 [shape = 'u8[1048576]{0}', space=vmem, size = 0x100000, scoped, tag = 'output window, operand 0']
    %7 = vsyncpa [#allocation3], 0
    %s8 = scalar_lea.sflag [#allocation3], 1
    %9 = vsyncpa %s8, 0
    %10 = vsyncpa [#allocation4], 0
    %s11 = scalar_lea.sflag [#allocation4], 1
    %12 = vsyncpa %s11, 0
    loop: start=0, step=1, limit=4
    $region2: #{tpu_custom_call.1} parent=1 // loop_pre_header
      _
    $region3: #{tpu_custom_call.1} parent=1 // loop_header
      %s14 = sphi 0, %s18
      %p15 = scmp.ge.s32.totalorder %s14, 4
      %s21 = sphi 0, %s33
      %s22 = sphi 0, %s29
      %s23 = sphi 0, %s21
      %s24 = sphi 0, %s22
      %s25 = sphi 0, %s23
      %s26 = sphi 0, %s24
      %s38 = sphi 0, %s40
      %s41 = sphi 0, %s38
      %s42 = sphi 0, %s41
      %s58 = sphi 0, %s42
      %s64 = sphi 0, %s66
      %s67 = sphi 0, %s64
      %s68 = sphi 0, %s67
      %s84 = sphi 0, %s68
      %s92 = sphi 0, %s94
      %s95 = sphi 0, %s92
      %s96 = sphi 0, %s95
      %s112 = sphi 0, %s96
    $region4: #{tpu_custom_call.1} parent=1 // loop_header_branch
      %17 = sbr.rel (%p15) target = $region8
    $region5: #{tpu_custom_call.1} parent=1 // loop_body
      %s19 = ssub.s32 %s14, 1
      %s20 = ssub.s32 %s14, 2
      %s27 = sadd.s32 1, %s22
      %p28 = scmp.ge.s32.totalorder %s27, 1
      %s29 = scalar_select %p28, 0, %s27
      %s30 = sadd.s32 1, %s21
      %s31 = scalar_select %p28, %s30, %s21
      %p32 = scmp.ge.s32.totalorder %s31, 2
      %s33 = scalar_select %p32, 0, %s31
      %s34 = ssub.s32 %s21, %s33
      %s35 = ssub.s32 %s22, %s29
      %s36 = sor.u32 %s34, %s35
      %p37 = scmp.eq.s32.totalorder %s36, 0
      %s39 = sadd.s32 %s38, 1
      %s40 = scalar_select %p37, %s38, %s39
      %p43 = pneg %p37
      %p44 = scmp.eq.s32.totalorder %s14, 1
      %p45 = por %p43, %p44
      %p46 = scmp.ne.s32.totalorder %s38, %s41
      %p47 = scmp.eq.s32.totalorder %s14, 0
      %p48 = por %p46, %p47
      %p49 = scmp.ne.s32.totalorder %s38, %s41
      %p50 = scmp.eq.s32.totalorder %s19, 1
      %p51 = por %p49, %p50
      %p52 = scmp.ne.s32.totalorder %s41, %s42
      %p53 = scmp.eq.s32.totalorder %s19, 0
      %p54 = por %p52, %p53
      %p55 = scmp.ne.s32.totalorder %s41, %s42
      %p56 = scmp.eq.s32.totalorder %s20, 1
      %p57 = por %p55, %p56
      %p59 = scmp.ne.s32.totalorder %s42, %s58
      %p60 = scmp.eq.s32.totalorder %s20, 0
      %p61 = por %p59, %p60
      %s62 = ssub.s32 %s21, %s33
      %p63 = scmp.eq.s32.totalorder %s62, 0
      %s65 = sadd.s32 %s64, 1
      %s66 = scalar_select %p63, %s64, %s65
      %p69 = pneg %p63
      %p70 = scmp.eq.s32.totalorder %s14, 1
      %p71 = por %p69, %p70
      %p72 = scmp.ne.s32.totalorder %s64, %s67
      %p73 = scmp.eq.s32.totalorder %s14, 0
      %p74 = por %p72, %p73
      %p75 = scmp.ne.s32.totalorder %s64, %s67
      %p76 = scmp.eq.s32.totalorder %s19, 1
      %p77 = por %p75, %p76
      %p78 = scmp.ne.s32.totalorder %s67, %s68
      %p79 = scmp.eq.s32.totalorder %s19, 0
      %p80 = por %p78, %p79
      %p81 = scmp.ne.s32.totalorder %s67, %s68
      %p82 = scmp.eq.s32.totalorder %s20, 1
      %p83 = por %p81, %p82
      %p85 = scmp.ne.s32.totalorder %s68, %s84
      %p86 = scmp.eq.s32.totalorder %s20, 0
      %p87 = por %p85, %p86
      %s88 = ssub.s32 %s21, %s33
      %s89 = ssub.s32 %s22, %s29
      %s90 = sor.u32 %s88, %s89
      %p91 = scmp.eq.s32.totalorder %s90, 0
      %s93 = sadd.s32 %s92, 1
      %s94 = scalar_select %p91, %s92, %s93
      %p97 = pneg %p91
      %p98 = scmp.eq.s32.totalorder %s14, 1
      %p99 = por %p97, %p98
      %p100 = scmp.ne.s32.totalorder %s92, %s95
      %p101 = scmp.eq.s32.totalorder %s14, 0
      %p102 = por %p100, %p101
      %p103 = scmp.ne.s32.totalorder %s92, %s95
      %p104 = scmp.eq.s32.totalorder %s19, 1
      %p105 = por %p103, %p104
      %p106 = scmp.ne.s32.totalorder %s95, %s96
      %p107 = scmp.eq.s32.totalorder %s19, 0
      %p108 = por %p106, %p107
      %p109 = scmp.ne.s32.totalorder %s95, %s96
      %p110 = scmp.eq.s32.totalorder %s20, 1
      %p111 = por %p109, %p110
      %p113 = scmp.ne.s32.totalorder %s96, %s112
      %p114 = scmp.eq.s32.totalorder %s20, 0
      %p115 = por %p113, %p114
      %p116 = scmp.le.s32.totalorder 1, %s14
      %p117 = scmp.lt.s32.totalorder %s14, 3
      %p118 = pnand %p116, %p117
      %p119 = pneg %p118
      // Predicated region
      $region9: #{tpu_custom_call.1} parent=5 // pred_check
        _
      $region10: #{tpu_custom_call.1} parent=5 // pred_check_branch
        %121 = sbr.rel (%p118) target = $region12
      $region11: #{tpu_custom_call.1} parent=5 // pred_region
        %s122 = ssub.s32 %s14, 1
      $region12: #{tpu_custom_call.1} parent=5 // pred_fallthru
        _
      %p123 = scmp.lt.s32.totalorder %s14, 2
      // Predicated region
      $region13: #{tpu_custom_call.1} parent=5 // pred_check
        %p124 = pneg %p123
      $region14: #{tpu_custom_call.1} parent=5 // pred_check_branch
        %126 = sbr.rel (%p124) target = $region16
      $region15: #{tpu_custom_call.1} parent=5 // pred_region
        // Predicated region
        $region17: #{tpu_custom_call.1} parent=15 // pred_check
          %p127 = pneg %p48
        $region18: #{tpu_custom_call.1} parent=15 // pred_check_branch
          %129 = sbr.rel (%p127) target = $region20
        $region19: #{tpu_custom_call.1} parent=15 // pred_region
          %s130 = sand.u32 %s38, 1
          %s131 = scalar_lea.sflag [#allocation3], %s130
          %s132 = sand.u32 %s38, 1
          %s133 = smul.addr %s132, 1024
          %s134 = scalar_lea.vmem [#allocation2], %s133
          %s135 = smul.u32 4, %s21
          %s136 = smul.u32 32, %s22
          %s138 = ssub.s32 16384, 16384
          %139 = vsyncadd %s131, %s138
          %s140 = smul.addr %s135, 32
          %s141 = sadd.s32 %s136, %s140
          %s142 = smul.addr %s141, 128
          %s143 = scalar_lea.hbm %s0, %s142
          %s144 = sshll.u32 %s134, 4
          %s145 = int_to_ptr.vmem [resolvable:$true] %s144
          %150 = dma.hbm_to_vmem [thread:$0]  %s143, 16384, %s145, %s131, 4096, 4096, 256
        $region20: #{tpu_custom_call.1} parent=15 // pred_fallthru
          _
        // Predicated region
        $region21: #{tpu_custom_call.1} parent=15 // pred_check
          %p151 = pneg %p74
        $region22: #{tpu_custom_call.1} parent=15 // pred_check_branch
          %153 = sbr.rel (%p151) target = $region24
        $region23: #{tpu_custom_call.1} parent=15 // pred_region
          %s154 = smul.u32 4, %s21
          %p155 = scmp.lt.s32.totalorder %s154, 7
          %s156 = scalar_select %p155, %s154, 7
          %s157 = smul.addr %s156, 8
          %s158 = scalar_lea.vmem %s1, %s157
          %s159 = smul.u32 4, %s21
        $region24: #{tpu_custom_call.1} parent=15 // pred_fallthru
          _
      $region16: #{tpu_custom_call.1} parent=5 // pred_fallthru
        _
      %p160 = scmp.le.s32.totalorder 1, %s14
      %p161 = scmp.lt.s32.totalorder %s14, 3
      %p162 = pnand %p160, %p161
      %p163 = pneg %p162
      // Predicated region
      $region25: #{tpu_custom_call.1} parent=5 // pred_check
        _
      $region26: #{tpu_custom_call.1} parent=5 // pred_check_branch
        %165 = sbr.rel (%p162) target = $region28
      $region27: #{tpu_custom_call.1} parent=5 // pred_region
        %s166 = ssub.s32 %s14, 1
        %s167 = sand.u32 %s41, 1
        %s168 = scalar_lea.sflag [#allocation3], %s167
        %s169 = sand.u32 %s41, 1
        %s170 = smul.addr %s169, 1024
        %s171 = scalar_lea.vmem [#allocation2], %s170
        // Predicated region
        $region29: #{tpu_custom_call.1} parent=27 // pred_check
          %p172 = pneg %p54
        $region30: #{tpu_custom_call.1} parent=27 // pred_check_branch
          %174 = sbr.rel (%p172) target = $region32
        $region31: #{tpu_custom_call.1} parent=27 // pred_region
          %175 = dma.done %s168, 16384
        $region32: #{tpu_custom_call.1} parent=27 // pred_fallthru
          _
        %s176 = sand.u32 %s41, 1
        %s177 = scalar_lea.sflag [#allocation3], %s176
        %s178 = sand.u32 %s41, 1
        %s179 = smul.addr %s178, 1024
        %s180 = scalar_lea.vmem [#allocation2], %s179
        %p181 = pneg %p54
        %p182 = pneg %p51
        %s183 = smul.u32 4, %s23
        %p184 = scmp.lt.s32.totalorder %s183, 7
        %s185 = scalar_select %p184, %s183, 7
        %s186 = smul.addr %s185, 8
        %s187 = scalar_lea.vmem %s1, %s186
        %p188 = pneg %p80
        %p189 = pneg %p77
        %p190 = pneg %p108
        %p191 = pneg %p105
        %s192 = sand.u32 %s95, 1
        %s193 = scalar_lea.sflag [#allocation4], %s192
        %s194 = sand.u32 %s95, 1
        %s195 = smul.addr %s194, 1024
        %s196 = scalar_lea.vmem [#allocation5], %s195
        %s197 = smul.u32 4, %s23
        %s198 = smul.u32 32, %s24
        %s199 = smul.u32 4, %s23
        %p200 = scmp.lt.s32.totalorder %s199, 7
        %s201 = scalar_select %p200, %s199, 7
        %s202 = smul.addr %s201, 8
        %s203 = scalar_lea.vmem %s1, %s202
        %s204 = smul.u32 4, %s23
        %s205 = smul.u32 4, %s23
        %s206 = smul.u32 32, %s24
        %v207 = vld [vmem:[%s171] sm:$0xff]
        %v208 = vld [vmem:[%s171 + $0x8] sm:$0xff]
        %v209 = vld [vmem:[%s171 + $0x10] sm:$0xff]
        %v210 = vld [vmem:[%s171 + $0x18] sm:$0xff]
        %v211 = vld [vmem:[%s171 + $0x20] sm:$0xff]
        %v212 = vld [vmem:[%s171 + $0x28] sm:$0xff]
        %v213 = vld [vmem:[%s171 + $0x30] sm:$0xff]
        %v214 = vld [vmem:[%s171 + $0x38] sm:$0xff]
        %v215 = vld [vmem:[%s171 + $0x40] sm:$0xff]
        %v216 = vld [vmem:[%s171 + $0x48] sm:$0xff]
        %v217 = vld [vmem:[%s171 + $0x50] sm:$0xff]
        %v218 = vld [vmem:[%s171 + $0x58] sm:$0xff]
        %v219 = vld [vmem:[%s171 + $0x60] sm:$0xff]
        %v220 = vld [vmem:[%s171 + $0x68] sm:$0xff]
        %v221 = vld [vmem:[%s171 + $0x70] sm:$0xff]
        %v222 = vld [vmem:[%s171 + $0x78] sm:$0xff]
        %v223 = vld [vmem:[%s171 + $0x80] sm:$0xff]
        %v224 = vld [vmem:[%s171 + $0x88] sm:$0xff]
        %v225 = vld [vmem:[%s171 + $0x90] sm:$0xff]
        %v226 = vld [vmem:[%s171 + $0x98] sm:$0xff]
        %v227 = vld [vmem:[%s171 + $0xa0] sm:$0xff]
        %v228 = vld [vmem:[%s171 + $0xa8] sm:$0xff]
        %v229 = vld [vmem:[%s171 + $0xb0] sm:$0xff]
        %v230 = vld [vmem:[%s171 + $0xb8] sm:$0xff]
        %v231 = vld [vmem:[%s171 + $0xc0] sm:$0xff]
        %v232 = vld [vmem:[%s171 + $0xc8] sm:$0xff]
        %v233 = vld [vmem:[%s171 + $0xd0] sm:$0xff]
        %v234 = vld [vmem:[%s171 + $0xd8] sm:$0xff]
        %v235 = vld [vmem:[%s171 + $0xe0] sm:$0xff]
        %v236 = vld [vmem:[%s171 + $0xe8] sm:$0xff]
        %v237 = vld [vmem:[%s171 + $0xf0] sm:$0xff]
        %v238 = vld [vmem:[%s171 + $0xf8] sm:$0xff]
        %v239 = vld [vmem:[%s171 + $0x100] sm:$0xff]
        %v240 = vld [vmem:[%s171 + $0x108] sm:$0xff]
        %v241 = vld [vmem:[%s171 + $0x110] sm:$0xff]
        %v242 = vld [vmem:[%s171 + $0x118] sm:$0xff]
        %v243 = vld [vmem:[%s171 + $0x120] sm:$0xff]
        %v244 = vld [vmem:[%s171 + $0x128] sm:$0xff]
        %v245 = vld [vmem:[%s171 + $0x130] sm:$0xff]
        %v246 = vld [vmem:[%s171 + $0x138] sm:$0xff]
        %v247 = vld [vmem:[%s171 + $0x140] sm:$0xff]
        %v248 = vld [vmem:[%s171 + $0x148] sm:$0xff]
        %v249 = vld [vmem:[%s171 + $0x150] sm:$0xff]
        %v250 = vld [vmem:[%s171 + $0x158] sm:$0xff]
        %v251 = vld [vmem:[%s171 + $0x160] sm:$0xff]
        %v252 = vld [vmem:[%s171 + $0x168] sm:$0xff]
        %v253 = vld [vmem:[%s171 + $0x170] sm:$0xff]
        %v254 = vld [vmem:[%s171 + $0x178] sm:$0xff]
        %v255 = vld [vmem:[%s171 + $0x180] sm:$0xff]
        %v256 = vld [vmem:[%s171 + $0x188] sm:$0xff]
        %v257 = vld [vmem:[%s171 + $0x190] sm:$0xff]
        %v258 = vld [vmem:[%s171 + $0x198] sm:$0xff]
        %v259 = vld [vmem:[%s171 + $0x1a0] sm:$0xff]
        %v260 = vld [vmem:[%s171 + $0x1a8] sm:$0xff]
        %v261 = vld [vmem:[%s171 + $0x1b0] sm:$0xff]
        %v262 = vld [vmem:[%s171 + $0x1b8] sm:$0xff]
        %v263 = vld [vmem:[%s171 + $0x1c0] sm:$0xff]
        %v264 = vld [vmem:[%s171 + $0x1c8] sm:$0xff]
        %v265 = vld [vmem:[%s171 + $0x1d0] sm:$0xff]
        %v266 = vld [vmem:[%s171 + $0x1d8] sm:$0xff]
        %v267 = vld [vmem:[%s171 + $0x1e0] sm:$0xff]
        %v268 = vld [vmem:[%s171 + $0x1e8] sm:$0xff]
        %v269 = vld [vmem:[%s171 + $0x1f0] sm:$0xff]
        %v270 = vld [vmem:[%s171 + $0x1f8] sm:$0xff]
        %v271 = vld [vmem:[%s171 + $0x200] sm:$0xff]
        %v272 = vld [vmem:[%s171 + $0x208] sm:$0xff]
        %v273 = vld [vmem:[%s171 + $0x210] sm:$0xff]
        %v274 = vld [vmem:[%s171 + $0x218] sm:$0xff]
        %v275 = vld [vmem:[%s171 + $0x220] sm:$0xff]
        %v276 = vld [vmem:[%s171 + $0x228] sm:$0xff]
        %v277 = vld [vmem:[%s171 + $0x230] sm:$0xff]
        %v278 = vld [vmem:[%s171 + $0x238] sm:$0xff]
        %v279 = vld [vmem:[%s171 + $0x240] sm:$0xff]
        %v280 = vld [vmem:[%s171 + $0x248] sm:$0xff]
        %v281 = vld [vmem:[%s171 + $0x250] sm:$0xff]
        %v282 = vld [vmem:[%s171 + $0x258] sm:$0xff]
        %v283 = vld [vmem:[%s171 + $0x260] sm:$0xff]
        %v284 = vld [vmem:[%s171 + $0x268] sm:$0xff]
        %v285 = vld [vmem:[%s171 + $0x270] sm:$0xff]
        %v286 = vld [vmem:[%s171 + $0x278] sm:$0xff]
        %v287 = vld [vmem:[%s171 + $0x280] sm:$0xff]
        %v288 = vld [vmem:[%s171 + $0x288] sm:$0xff]
        %v289 = vld [vmem:[%s171 + $0x290] sm:$0xff]
        %v290 = vld [vmem:[%s171 + $0x298] sm:$0xff]
        %v291 = vld [vmem:[%s171 + $0x2a0] sm:$0xff]
        %v292 = vld [vmem:[%s171 + $0x2a8] sm:$0xff]
        %v293 = vld [vmem:[%s171 + $0x2b0] sm:$0xff]
        %v294 = vld [vmem:[%s171 + $0x2b8] sm:$0xff]
        %v295 = vld [vmem:[%s171 + $0x2c0] sm:$0xff]
        %v296 = vld [vmem:[%s171 + $0x2c8] sm:$0xff]
        %v297 = vld [vmem:[%s171 + $0x2d0] sm:$0xff]
        %v298 = vld [vmem:[%s171 + $0x2d8] sm:$0xff]
        %v299 = vld [vmem:[%s171 + $0x2e0] sm:$0xff]
        %v300 = vld [vmem:[%s171 + $0x2e8] sm:$0xff]
        %v301 = vld [vmem:[%s171 + $0x2f0] sm:$0xff]
        %v302 = vld [vmem:[%s171 + $0x2f8] sm:$0xff]
        %v303 = vld [vmem:[%s171 + $0x300] sm:$0xff]
        %v304 = vld [vmem:[%s171 + $0x308] sm:$0xff]
        %v305 = vld [vmem:[%s171 + $0x310] sm:$0xff]
        %v306 = vld [vmem:[%s171 + $0x318] sm:$0xff]
        %v307 = vld [vmem:[%s171 + $0x320] sm:$0xff]
        %v308 = vld [vmem:[%s171 + $0x328] sm:$0xff]
        %v309 = vld [vmem:[%s171 + $0x330] sm:$0xff]
        %v310 = vld [vmem:[%s171 + $0x338] sm:$0xff]
        %v311 = vld [vmem:[%s171 + $0x340] sm:$0xff]
        %v312 = vld [vmem:[%s171 + $0x348] sm:$0xff]
        %v313 = vld [vmem:[%s171 + $0x350] sm:$0xff]
        %v314 = vld [vmem:[%s171 + $0x358] sm:$0xff]
        %v315 = vld [vmem:[%s171 + $0x360] sm:$0xff]
        %v316 = vld [vmem:[%s171 + $0x368] sm:$0xff]
        %v317 = vld [vmem:[%s171 + $0x370] sm:$0xff]
        %v318 = vld [vmem:[%s171 + $0x378] sm:$0xff]
        %v319 = vld [vmem:[%s171 + $0x380] sm:$0xff]
        %v320 = vld [vmem:[%s171 + $0x388] sm:$0xff]
        %v321 = vld [vmem:[%s171 + $0x390] sm:$0xff]
        %v322 = vld [vmem:[%s171 + $0x398] sm:$0xff]
        %v323 = vld [vmem:[%s171 + $0x3a0] sm:$0xff]
        %v324 = vld [vmem:[%s171 + $0x3a8] sm:$0xff]
        %v325 = vld [vmem:[%s171 + $0x3b0] sm:$0xff]
        %v326 = vld [vmem:[%s171 + $0x3b8] sm:$0xff]
        %v327 = vld [vmem:[%s171 + $0x3c0] sm:$0xff]
        %v328 = vld [vmem:[%s171 + $0x3c8] sm:$0xff]
        %v329 = vld [vmem:[%s171 + $0x3d0] sm:$0xff]
        %v330 = vld [vmem:[%s171 + $0x3d8] sm:$0xff]
        %v331 = vld [vmem:[%s171 + $0x3e0] sm:$0xff]
        %v332 = vld [vmem:[%s171 + $0x3e8] sm:$0xff]
        %v333 = vld [vmem:[%s171 + $0x3f0] sm:$0xff]
        %v334 = vld [vmem:[%s171 + $0x3f8] sm:$0xff]
        %v335 = vld [vmem:[%s203] sm:$0xff]
        %v336 = vld [vmem:[%s203 + $0x8] sm:$0xff]
        %v337 = vld [vmem:[%s203 + $0x10] sm:$0xff]
        %v338 = vld [vmem:[%s203 + $0x18] sm:$0xff]
        %340 = vset.pattern.permute.xlu0 0
        %341 = vperm.xlu0 %340, %v335
        %v342 = vpop.permute.xlu0 %341
        %345 = vset.pattern.permute.xlu0 0
        %346 = vperm.xlu0 %345, %v336
        %v347 = vpop.permute.xlu0 %346
        %350 = vset.pattern.permute.xlu0 0
        %351 = vperm.xlu0 %350, %v337
        %v352 = vpop.permute.xlu0 %351
        %355 = vset.pattern.permute.xlu0 0
        %356 = vperm.xlu0 %355, %v338
        %v357 = vpop.permute.xlu0 %356
        %v359 = vmul.f32 %v207, %v342
        %v360 = vmul.f32 %v208, %v342
        %v361 = vmul.f32 %v209, %v342
        %v362 = vmul.f32 %v210, %v342
        %v363 = vmul.f32 %v211, %v342
        %v364 = vmul.f32 %v212, %v342
        %v365 = vmul.f32 %v213, %v342
        %v366 = vmul.f32 %v214, %v342
        %v367 = vmul.f32 %v215, %v342
        %v368 = vmul.f32 %v216, %v342
        %v369 = vmul.f32 %v217, %v342
        %v370 = vmul.f32 %v218, %v342
        %v371 = vmul.f32 %v219, %v342
        %v372 = vmul.f32 %v220, %v342
        %v373 = vmul.f32 %v221, %v342
        %v374 = vmul.f32 %v222, %v342
        %v375 = vmul.f32 %v223, %v342
        %v376 = vmul.f32 %v224, %v342
        %v377 = vmul.f32 %v225, %v342
        %v378 = vmul.f32 %v226, %v342
        %v379 = vmul.f32 %v227, %v342
        %v380 = vmul.f32 %v228, %v342
        %v381 = vmul.f32 %v229, %v342
        %v382 = vmul.f32 %v230, %v342
        %v383 = vmul.f32 %v231, %v342
        %v384 = vmul.f32 %v232, %v342
        %v385 = vmul.f32 %v233, %v342
        %v386 = vmul.f32 %v234, %v342
        %v387 = vmul.f32 %v235, %v342
        %v388 = vmul.f32 %v236, %v342
        %v389 = vmul.f32 %v237, %v342
        %v390 = vmul.f32 %v238, %v342
        %v391 = vmul.f32 %v239, %v347
        %v392 = vmul.f32 %v240, %v347
        %v393 = vmul.f32 %v241, %v347
        %v394 = vmul.f32 %v242, %v347
        %v395 = vmul.f32 %v243, %v347
        %v396 = vmul.f32 %v244, %v347
        %v397 = vmul.f32 %v245, %v347
        %v398 = vmul.f32 %v246, %v347
        %v399 = vmul.f32 %v247, %v347
        %v400 = vmul.f32 %v248, %v347
        %v401 = vmul.f32 %v249, %v347
        %v402 = vmul.f32 %v250, %v347
        %v403 = vmul.f32 %v251, %v347
        %v404 = vmul.f32 %v252, %v347
        %v405 = vmul.f32 %v253, %v347
        %v406 = vmul.f32 %v254, %v347
        %v407 = vmul.f32 %v255, %v347
        %v408 = vmul.f32 %v256, %v347
        %v409 = vmul.f32 %v257, %v347
        %v410 = vmul.f32 %v258, %v347
        %v411 = vmul.f32 %v259, %v347
        %v412 = vmul.f32 %v260, %v347
        %v413 = vmul.f32 %v261, %v347
        %v414 = vmul.f32 %v262, %v347
        %v415 = vmul.f32 %v263, %v347
        %v416 = vmul.f32 %v264, %v347
        %v417 = vmul.f32 %v265, %v347
        %v418 = vmul.f32 %v266, %v347
        %v419 = vmul.f32 %v267, %v347
        %v420 = vmul.f32 %v268, %v347
        %v421 = vmul.f32 %v269, %v347
        %v422 = vmul.f32 %v270, %v347
        %v423 = vmul.f32 %v271, %v352
        %v424 = vmul.f32 %v272, %v352
        %v425 = vmul.f32 %v273, %v352
        %v426 = vmul.f32 %v274, %v352
        %v427 = vmul.f32 %v275, %v352
        %v428 = vmul.f32 %v276, %v352
        %v429 = vmul.f32 %v277, %v352
        %v430 = vmul.f32 %v278, %v352
        %v431 = vmul.f32 %v279, %v352
        %v432 = vmul.f32 %v280, %v352
        %v433 = vmul.f32 %v281, %v352
        %v434 = vmul.f32 %v282, %v352
        %v435 = vmul.f32 %v283, %v352
        %v436 = vmul.f32 %v284, %v352
        %v437 = vmul.f32 %v285, %v352
        %v438 = vmul.f32 %v286, %v352
        %v439 = vmul.f32 %v287, %v352
        %v440 = vmul.f32 %v288, %v352
        %v441 = vmul.f32 %v289, %v352
        %v442 = vmul.f32 %v290, %v352
        %v443 = vmul.f32 %v291, %v352
        %v444 = vmul.f32 %v292, %v352
        %v445 = vmul.f32 %v293, %v352
        %v446 = vmul.f32 %v294, %v352
        %v447 = vmul.f32 %v295, %v352
        %v448 = vmul.f32 %v296, %v352
        %v449 = vmul.f32 %v297, %v352
        %v450 = vmul.f32 %v298, %v352
        %v451 = vmul.f32 %v299, %v352
        %v452 = vmul.f32 %v300, %v352
        %v453 = vmul.f32 %v301, %v352
        %v454 = vmul.f32 %v302, %v352
        %v455 = vmul.f32 %v303, %v357
        %v456 = vmul.f32 %v304, %v357
        %v457 = vmul.f32 %v305, %v357
        %v458 = vmul.f32 %v306, %v357
        %v459 = vmul.f32 %v307, %v357
        %v460 = vmul.f32 %v308, %v357
        %v461 = vmul.f32 %v309, %v357
        %v462 = vmul.f32 %v310, %v357
        %v463 = vmul.f32 %v311, %v357
        %v464 = vmul.f32 %v312, %v357
        %v465 = vmul.f32 %v313, %v357
        %v466 = vmul.f32 %v314, %v357
        %v467 = vmul.f32 %v315, %v357
        %v468 = vmul.f32 %v316, %v357
        %v469 = vmul.f32 %v317, %v357
        %v470 = vmul.f32 %v318, %v357
        %v471 = vmul.f32 %v319, %v357
        %v472 = vmul.f32 %v320, %v357
        %v473 = vmul.f32 %v321, %v357
        %v474 = vmul.f32 %v322, %v357
        %v475 = vmul.f32 %v323, %v357
        %v476 = vmul.f32 %v324, %v357
        %v477 = vmul.f32 %v325, %v357
        %v478 = vmul.f32 %v326, %v357
        %v479 = vmul.f32 %v327, %v357
        %v480 = vmul.f32 %v328, %v357
        %v481 = vmul.f32 %v329, %v357
        %v482 = vmul.f32 %v330, %v357
        %v483 = vmul.f32 %v331, %v357
        %v484 = vmul.f32 %v332, %v357
        %v485 = vmul.f32 %v333, %v357
        %v486 = vmul.f32 %v334, %v357
        %487 = vst [vmem:[%s196] sm:$0xff] %v359
        %488 = vst [vmem:[%s196 + $0x8] sm:$0xff] %v360
        %489 = vst [vmem:[%s196 + $0x10] sm:$0xff] %v361
        %490 = vst [vmem:[%s196 + $0x18] sm:$0xff] %v362
        %491 = vst [vmem:[%s196 + $0x20] sm:$0xff] %v363
        %492 = vst [vmem:[%s196 + $0x28] sm:$0xff] %v364
        %493 = vst [vmem:[%s196 + $0x30] sm:$0xff] %v365
        %494 = vst [vmem:[%s196 + $0x38] sm:$0xff] %v366
        %495 = vst [vmem:[%s196 + $0x40] sm:$0xff] %v367
        %496 = vst [vmem:[%s196 + $0x48] sm:$0xff] %v368
        %497 = vst [vmem:[%s196 + $0x50] sm:$0xff] %v369
        %498 = vst [vmem:[%s196 + $0x58] sm:$0xff] %v370
        %499 = vst [vmem:[%s196 + $0x60] sm:$0xff] %v371
        %500 = vst [vmem:[%s196 + $0x68] sm:$0xff] %v372
        %501 = vst [vmem:[%s196 + $0x70] sm:$0xff] %v373
        %502 = vst [vmem:[%s196 + $0x78] sm:$0xff] %v374
        %503 = vst [vmem:[%s196 + $0x80] sm:$0xff] %v375
        %504 = vst [vmem:[%s196 + $0x88] sm:$0xff] %v376
        %505 = vst [vmem:[%s196 + $0x90] sm:$0xff] %v377
        %506 = vst [vmem:[%s196 + $0x98] sm:$0xff] %v378
        %507 = vst [vmem:[%s196 + $0xa0] sm:$0xff] %v379
        %508 = vst [vmem:[%s196 + $0xa8] sm:$0xff] %v380
        %509 = vst [vmem:[%s196 + $0xb0] sm:$0xff] %v381
        %510 = vst [vmem:[%s196 + $0xb8] sm:$0xff] %v382
        %511 = vst [vmem:[%s196 + $0xc0] sm:$0xff] %v383
        %512 = vst [vmem:[%s196 + $0xc8] sm:$0xff] %v384
        %513 = vst [vmem:[%s196 + $0xd0] sm:$0xff] %v385
        %514 = vst [vmem:[%s196 + $0xd8] sm:$0xff] %v386
        %515 = vst [vmem:[%s196 + $0xe0] sm:$0xff] %v387
        %516 = vst [vmem:[%s196 + $0xe8] sm:$0xff] %v388
        %517 = vst [vmem:[%s196 + $0xf0] sm:$0xff] %v389
        %518 = vst [vmem:[%s196 + $0xf8] sm:$0xff] %v390
        %519 = vst [vmem:[%s196 + $0x100] sm:$0xff] %v391
        %520 = vst [vmem:[%s196 + $0x108] sm:$0xff] %v392
        %521 = vst [vmem:[%s196 + $0x110] sm:$0xff] %v393
        %522 = vst [vmem:[%s196 + $0x118] sm:$0xff] %v394
        %523 = vst [vmem:[%s196 + $0x120] sm:$0xff] %v395
        %524 = vst [vmem:[%s196 + $0x128] sm:$0xff] %v396
        %525 = vst [vmem:[%s196 + $0x130] sm:$0xff] %v397
        %526 = vst [vmem:[%s196 + $0x138] sm:$0xff] %v398
        %527 = vst [vmem:[%s196 + $0x140] sm:$0xff] %v399
        %528 = vst [vmem:[%s196 + $0x148] sm:$0xff] %v400
        %529 = vst [vmem:[%s196 + $0x150] sm:$0xff] %v401
        %530 = vst [vmem:[%s196 + $0x158] sm:$0xff] %v402
        %531 = vst [vmem:[%s196 + $0x160] sm:$0xff] %v403
        %532 = vst [vmem:[%s196 + $0x168] sm:$0xff] %v404
        %533 = vst [vmem:[%s196 + $0x170] sm:$0xff] %v405
        %534 = vst [vmem:[%s196 + $0x178] sm:$0xff] %v406
        %535 = vst [vmem:[%s196 + $0x180] sm:$0xff] %v407
        %536 = vst [vmem:[%s196 + $0x188] sm:$0xff] %v408
        %537 = vst [vmem:[%s196 + $0x190] sm:$0xff] %v409
        %538 = vst [vmem:[%s196 + $0x198] sm:$0xff] %v410
        %539 = vst [vmem:[%s196 + $0x1a0] sm:$0xff] %v411
        %540 = vst [vmem:[%s196 + $0x1a8] sm:$0xff] %v412
        %541 = vst [vmem:[%s196 + $0x1b0] sm:$0xff] %v413
        %542 = vst [vmem:[%s196 + $0x1b8] sm:$0xff] %v414
        %543 = vst [vmem:[%s196 + $0x1c0] sm:$0xff] %v415
        %544 = vst [vmem:[%s196 + $0x1c8] sm:$0xff] %v416
        %545 = vst [vmem:[%s196 + $0x1d0] sm:$0xff] %v417
        %546 = vst [vmem:[%s196 + $0x1d8] sm:$0xff] %v418
        %547 = vst [vmem:[%s196 + $0x1e0] sm:$0xff] %v419
        %548 = vst [vmem:[%s196 + $0x1e8] sm:$0xff] %v420
        %549 = vst [vmem:[%s196 + $0x1f0] sm:$0xff] %v421
        %550 = vst [vmem:[%s196 + $0x1f8] sm:$0xff] %v422
        %551 = vst [vmem:[%s196 + $0x200] sm:$0xff] %v423
        %552 = vst [vmem:[%s196 + $0x208] sm:$0xff] %v424
        %553 = vst [vmem:[%s196 + $0x210] sm:$0xff] %v425
        %554 = vst [vmem:[%s196 + $0x218] sm:$0xff] %v426
        %555 = vst [vmem:[%s196 + $0x220] sm:$0xff] %v427
        %556 = vst [vmem:[%s196 + $0x228] sm:$0xff] %v428
        %557 = vst [vmem:[%s196 + $0x230] sm:$0xff] %v429
        %558 = vst [vmem:[%s196 + $0x238] sm:$0xff] %v430
        %559 = vst [vmem:[%s196 + $0x240] sm:$0xff] %v431
        %560 = vst [vmem:[%s196 + $0x248] sm:$0xff] %v432
        %561 = vst [vmem:[%s196 + $0x250] sm:$0xff] %v433
        %562 = vst [vmem:[%s196 + $0x258] sm:$0xff] %v434
        %563 = vst [vmem:[%s196 + $0x260] sm:$0xff] %v435
        %564 = vst [vmem:[%s196 + $0x268] sm:$0xff] %v436
        %565 = vst [vmem:[%s196 + $0x270] sm:$0xff] %v437
        %566 = vst [vmem:[%s196 + $0x278] sm:$0xff] %v438
        %567 = vst [vmem:[%s196 + $0x280] sm:$0xff] %v439
        %568 = vst [vmem:[%s196 + $0x288] sm:$0xff] %v440
        %569 = vst [vmem:[%s196 + $0x290] sm:$0xff] %v441
        %570 = vst [vmem:[%s196 + $0x298] sm:$0xff] %v442
        %571 = vst [vmem:[%s196 + $0x2a0] sm:$0xff] %v443
        %572 = vst [vmem:[%s196 + $0x2a8] sm:$0xff] %v444
        %573 = vst [vmem:[%s196 + $0x2b0] sm:$0xff] %v445
        %574 = vst [vmem:[%s196 + $0x2b8] sm:$0xff] %v446
        %575 = vst [vmem:[%s196 + $0x2c0] sm:$0xff] %v447
        %576 = vst [vmem:[%s196 + $0x2c8] sm:$0xff] %v448
        %577 = vst [vmem:[%s196 + $0x2d0] sm:$0xff] %v449
        %578 = vst [vmem:[%s196 + $0x2d8] sm:$0xff] %v450
        %579 = vst [vmem:[%s196 + $0x2e0] sm:$0xff] %v451
        %580 = vst [vmem:[%s196 + $0x2e8] sm:$0xff] %v452
        %581 = vst [vmem:[%s196 + $0x2f0] sm:$0xff] %v453
        %582 = vst [vmem:[%s196 + $0x2f8] sm:$0xff] %v454
        %583 = vst [vmem:[%s196 + $0x300] sm:$0xff] %v455
        %584 = vst [vmem:[%s196 + $0x308] sm:$0xff] %v456
        %585 = vst [vmem:[%s196 + $0x310] sm:$0xff] %v457
        %586 = vst [vmem:[%s196 + $0x318] sm:$0xff] %v458
        %587 = vst [vmem:[%s196 + $0x320] sm:$0xff] %v459
        %588 = vst [vmem:[%s196 + $0x328] sm:$0xff] %v460
        %589 = vst [vmem:[%s196 + $0x330] sm:$0xff] %v461
        %590 = vst [vmem:[%s196 + $0x338] sm:$0xff] %v462
        %591 = vst [vmem:[%s196 + $0x340] sm:$0xff] %v463
        %592 = vst [vmem:[%s196 + $0x348] sm:$0xff] %v464
        %593 = vst [vmem:[%s196 + $0x350] sm:$0xff] %v465
        %594 = vst [vmem:[%s196 + $0x358] sm:$0xff] %v466
        %595 = vst [vmem:[%s196 + $0x360] sm:$0xff] %v467
        %596 = vst [vmem:[%s196 + $0x368] sm:$0xff] %v468
        %597 = vst [vmem:[%s196 + $0x370] sm:$0xff] %v469
        %598 = vst [vmem:[%s196 + $0x378] sm:$0xff] %v470
        %599 = vst [vmem:[%s196 + $0x380] sm:$0xff] %v471
        %600 = vst [vmem:[%s196 + $0x388] sm:$0xff] %v472
        %601 = vst [vmem:[%s196 + $0x390] sm:$0xff] %v473
        %602 = vst [vmem:[%s196 + $0x398] sm:$0xff] %v474
        %603 = vst [vmem:[%s196 + $0x3a0] sm:$0xff] %v475
        %604 = vst [vmem:[%s196 + $0x3a8] sm:$0xff] %v476
        %605 = vst [vmem:[%s196 + $0x3b0] sm:$0xff] %v477
        %606 = vst [vmem:[%s196 + $0x3b8] sm:$0xff] %v478
        %607 = vst [vmem:[%s196 + $0x3c0] sm:$0xff] %v479
        %608 = vst [vmem:[%s196 + $0x3c8] sm:$0xff] %v480
        %609 = vst [vmem:[%s196 + $0x3d0] sm:$0xff] %v481
        %610 = vst [vmem:[%s196 + $0x3d8] sm:$0xff] %v482
        %611 = vst [vmem:[%s196 + $0x3e0] sm:$0xff] %v483
        %612 = vst [vmem:[%s196 + $0x3e8] sm:$0xff] %v484
        %613 = vst [vmem:[%s196 + $0x3f0] sm:$0xff] %v485
        %614 = vst [vmem:[%s196 + $0x3f8] sm:$0xff] %v486
        %s615 = sand.u32 %s95, 1
        %s616 = scalar_lea.sflag [#allocation4], %s615
        %s617 = sand.u32 %s95, 1
        %s618 = smul.addr %s617, 1024
        %s619 = scalar_lea.vmem [#allocation5], %s618
        // Predicated region
        $region33: #{tpu_custom_call.1} parent=27 // pred_check
          %p620 = pneg %p105
        $region34: #{tpu_custom_call.1} parent=27 // pred_check_branch
          %622 = sbr.rel (%p620) target = $region36
        $region35: #{tpu_custom_call.1} parent=27 // pred_region
          %s623 = smul.u32 4, %s23
          %s624 = smul.u32 32, %s24
          %s626 = ssub.s32 16384, 16384
          %627 = vsyncadd %s616, %s626
          %s628 = smul.addr %s623, 32
          %s629 = sadd.s32 %s624, %s628
          %s630 = smul.addr %s629, 128
          %s631 = scalar_lea.hbm %s2, %s630
          %s632 = sshll.u32 %s619, 4
          %s633 = int_to_ptr.vmem [resolvable:$true] %s632
          %638 = dma.vmem_to_hbm [thread:$0]  %s633, 16384, %s631, %s616, 4096, 4096, 256
        $region36: #{tpu_custom_call.1} parent=27 // pred_fallthru
          _
      $region28: #{tpu_custom_call.1} parent=5 // pred_fallthru
        _
      %p639 = scmp.le.s32.totalorder 2, %s14
      // Predicated region
      $region37: #{tpu_custom_call.1} parent=5 // pred_check
        %p640 = pneg %p639
      $region38: #{tpu_custom_call.1} parent=5 // pred_check_branch
        %642 = sbr.rel (%p640) target = $region40
      $region39: #{tpu_custom_call.1} parent=5 // pred_region
        %s643 = ssub.s32 %s14, 2
        // Predicated region
        $region41: #{tpu_custom_call.1} parent=39 // pred_check
          %p644 = pneg %p111
        $region42: #{tpu_custom_call.1} parent=39 // pred_check_branch
          %646 = sbr.rel (%p644) target = $region44
        $region43: #{tpu_custom_call.1} parent=39 // pred_region
          %s647 = sand.u32 %s96, 1
          %s648 = scalar_lea.sflag [#allocation4], %s647
          %s649 = sand.u32 %s96, 1
          %s650 = smul.addr %s649, 1024
          %s651 = scalar_lea.vmem [#allocation5], %s650
          %652 = dma.done %s648, 16384
        $region44: #{tpu_custom_call.1} parent=39 // pred_fallthru
          _
      $region40: #{tpu_custom_call.1} parent=5 // pred_fallthru
        _
    $region6: #{tpu_custom_call.1} parent=1 // loop_footer
      %s18 = sadd.s32 1, %s14
    $region7: #{tpu_custom_call.1} parent=1 // loop_footer_branch
      %13 = sbr.rel target = $region3
    $region8: #{tpu_custom_call.1} parent=1 // loop_exit
      _
    %653 = vsyncpa [#allocation3], 1
    %s654 = scalar_lea.sflag [#allocation3], 1
    %655 = vsyncpa %s654, 1
    %656 = vsyncpa [#allocation4], 1
    %s657 = scalar_lea.sflag [#allocation4], 1
    %658 = vsyncpa %s657, 1

</llo_original>
